<compile_context>
chip_gen: v7x
topology: tpu7x:2x2x1
jax: 0.10.0
libtpu: 0.0.40
codegen_flags: <defaults>
</compile_context>

<pallas_src>
import jax
import jax.numpy as jnp
from jax.experimental import pallas as pl
from jax.experimental.pallas import tpu as pltpu


def _uncertainty_kernel(x_ref, w_ref, b_ref, mean_ref, logvar_ref):
    # x_ref: (TB, D); w_ref: (D, 2*O) fused weight; b_ref: (1, 2*O) fused bias.
    out = jnp.dot(x_ref[...], w_ref[...], preferred_element_type=jnp.float32)
    out = out + b_ref[...]
    o = mean_ref.shape[-1]
    mean_ref[...] = out[:, :o].astype(mean_ref.dtype)
    logvar_ref[...] = out[:, o:].astype(logvar_ref.dtype)


def fuse_params(w_mean, b_mean, w_logvar, b_logvar):
    """Fuse the two Linear branches ONCE (call at init time, not per forward)."""
    w = jnp.concatenate([w_mean, w_logvar], axis=1)            # (D, 2*O)
    b = jnp.concatenate([b_mean, b_logvar], axis=0)[None, :]   # (1, 2*O)
    return w, b


def _round_down(x, m):
    return (x // m) * m


def _round_up(x, m):
    return ((x + m - 1) // m) * m


def uncertainty_head_fused(x, w_fused, b_fused, *, target_tile_bytes=4 << 20):
    """x: (B, D); w_fused: (D, 2*O); b_fused: (1, 2*O). Returns (mean, log_var)."""
    B, D = x.shape
    two_o = w_fused.shape[1]
    o = two_o // 2
    itemsize = jnp.dtype(x.dtype).itemsize

    # ---- Batch tile sizing: by bytes, sublane(8)-aligned, megacore-friendly. ----
    if B <= 8:
        TB = B                                       # single full-batch tile
    else:
        TB = _round_down(max(target_tile_bytes // (itemsize * D), 8), 8)
        TB = min(TB, _round_up(B, 8))
        if TB >= B:
            # One tile would cover the whole batch; split in two so the
            # "parallel" batch axis can be sharded across v7x's two TensorCores.
            TB = max(8, _round_up(pl.cdiv(B, 2), 8))
        if TB >= B:
            TB = B
    num_tiles = pl.cdiv(B, TB)   # ragged last tile handled by Pallas (no jnp.pad)

    # ---- VMEM budget: estimate footprint, request with headroom (cap 48 MiB). ----
    x_bufs = 3 if num_tiles >= 3 else 2
    vmem_bytes = (x_bufs * TB * D * itemsize          # pipelined x tiles
                  + 2 * D * two_o * itemsize          # fused weight (resident)
                  + 2 * two_o * itemsize              # fused bias
                  + 2 * 2 * TB * o * itemsize)        # two double-buffered outputs
    vmem_limit = int(min(max(2 * vmem_bytes, 16 << 20), 48 << 20))

    x_spec_kwargs = {}
    if num_tiles >= 3:
        # Deeper x pipeline: DMA is the entire cost; cheap insurance at tile edges.
        x_spec_kwargs["pipeline_mode"] = pl.Buffered(3)

    cost = pl.CostEstimate(
        flops=2 * B * D * two_o,
        transcendentals=0,
        bytes_accessed=itemsize * (B * D + D * two_o + two_o + 2 * B * o),
    )

    mean, log_var = pl.pallas_call(
        _uncertainty_kernel,
        out_shape=(
            jax.ShapeDtypeStruct((B, o), x.dtype),
            jax.ShapeDtypeStruct((B, o), x.dtype),
        ),
        grid=(num_tiles,),
        in_specs=[
            pl.BlockSpec((TB, D), lambda i: (i, 0), **x_spec_kwargs),   # x (streamed)
            pl.BlockSpec((D, two_o), lambda i: (0, 0)),                 # fused W (resident)
            pl.BlockSpec((1, two_o), lambda i: (0, 0)),                 # fused b (resident)
        ],
        out_specs=(
            pl.BlockSpec((TB, o), lambda i: (i, 0)),
            pl.BlockSpec((TB, o), lambda i: (i, 0)),
        ),
        compiler_params=pltpu.CompilerParams(
            dimension_semantics=("parallel",),
            vmem_limit_bytes=vmem_limit,
        ),
        cost_estimate=cost,
    )(x, w_fused, b_fused)
    return mean, log_var


def uncertainty_head(x, w_mean, b_mean, w_logvar, b_logvar, **kwargs):
    """Convenience wrapper matching UncertaintyHead.forward(x) -> (mean, log_var)."""
    w, b = fuse_params(w_mean, b_mean, w_logvar, b_logvar)
    return uncertainty_head_fused(x, w, b, **kwargs)


def init_params(key, input_dim, output_dim, dtype=jnp.float32):
    """Deterministic init mimicking nn.Linear's default U(-1/sqrt(D), 1/sqrt(D))."""
    k1, k2, k3, k4 = jax.random.split(key, 4)
    bound = 1.0 / (input_dim ** 0.5)
    w_mean = jax.random.uniform(k1, (input_dim, output_dim), dtype, -bound, bound)
    b_mean = jax.random.uniform(k2, (output_dim,), dtype, -bound, bound)
    w_logvar = jax.random.uniform(k3, (input_dim, output_dim), dtype, -bound, bound)
    b_logvar = jax.random.uniform(k4, (output_dim,), dtype, -bound, bound)
    return w_mean, b_mean, w_logvar, b_logvar


if __name__ == "__main__":
    key = jax.random.PRNGKey(0)
    B, D, O = 2, 32, 8   # batch=2, input_dim=32, output_dim=8

    kx, kp = jax.random.split(key)
    x = jax.random.normal(kx, (B, D), jnp.float32)
    w_mean, b_mean, w_logvar, b_logvar = init_params(kp, D, O)

    # Hoist the branch fusion out of the forward path (done once here).
    w_fused, b_fused = fuse_params(w_mean, b_mean, w_logvar, b_logvar)

    mean, log_var = uncertainty_head_fused(x, w_fused, b_fused)
    jax.block_until_ready((mean, log_var))

    # Reference check in plain JAX (same semantics as the PyTorch module).
    mean_ref = x @ w_mean + b_mean
    logvar_ref = x @ w_logvar + b_logvar
    assert mean.shape == (B, O) and log_var.shape == (B, O)
    assert jnp.allclose(mean, mean_ref, atol=1e-5, rtol=1e-5)
    assert jnp.allclose(log_var, logvar_ref, atol=1e-5, rtol=1e-5)

    # Exercise the tiled + ragged-last-tile path (no jnp.pad; B not a tile multiple).
    B2 = 20
    x2 = jax.random.normal(jax.random.PRNGKey(1), (B2, D), jnp.float32)
    mean2, log_var2 = uncertainty_head(x2, w_mean, b_mean, w_logvar, b_logvar)
    jax.block_until_ready((mean2, log_var2))
    assert jnp.allclose(mean2, x2 @ w_mean + b_mean, atol=1e-5, rtol=1e-5)
    assert jnp.allclose(log_var2, x2 @ w_logvar + b_logvar, atol=1e-5, rtol=1e-5)

    # Exercise the multi-tile Buffered(3) pipeline path (small tiles forced by bytes).
    B3 = 203
    x3 = jax.random.normal(jax.random.PRNGKey(2), (B3, D), jnp.float32)
    mean3, log_var3 = uncertainty_head_fused(
        x3, w_fused, b_fused, target_tile_bytes=8 * D * 4)   # -> TB=8, 26 tiles, ragged
    jax.block_until_ready((mean3, log_var3))
    assert jnp.allclose(mean3, x3 @ w_mean + b_mean, atol=1e-5, rtol=1e-5)
    assert jnp.allclose(log_var3, x3 @ w_logvar + b_logvar, atol=1e-5, rtol=1e-5)

    print("KERNEL_OK")
</pallas_src>

<mosaic_0001>
module attributes {stable_mosaic.version = 11 : i64} {
  func.func @_uncertainty_kernel(%arg0: i32, %arg1: memref<2x32xf32, #tpu.memory_space<vmem>>, %arg2: memref<32x16xf32, #tpu.memory_space<vmem>>, %arg3: memref<1x16xf32, #tpu.memory_space<vmem>>, %arg4: memref<2x8xf32, #tpu.memory_space<vmem>>, %arg5: memref<2x8xf32, #tpu.memory_space<vmem>>) attributes {dimension_semantics = [#tpu.dimension_semantics<parallel>], iteration_bounds = array<i64: 1>, scalar_prefetch = 0 : i64, scratch_operands = 0 : i64, tpu.core_type = #tpu.core_type<tc>, window_params = [{transform_indices = @transform_0, window_bounds = array<i64: 2, 32>}, {pipeline_mode = #tpu.pipeline_mode<synchronous>, transform_indices = @transform_1, window_bounds = array<i64: 32, 16>}, {pipeline_mode = #tpu.pipeline_mode<synchronous>, transform_indices = @transform_2, window_bounds = array<i64: 1, 16>}, {transform_indices = @transform_3, window_bounds = array<i64: 2, 8>}, {transform_indices = @transform_4, window_bounds = array<i64: 2, 8>}]} {
    %c0 = arith.constant 0 : index
    %c0_0 = arith.constant 0 : index
    %0 = vector.load %arg1[%c0, %c0_0] : memref<2x32xf32, #tpu.memory_space<vmem>>, vector<2x32xf32>
    %c0_1 = arith.constant 0 : index
    %c0_2 = arith.constant 0 : index
    %1 = vector.load %arg2[%c0_1, %c0_2] : memref<32x16xf32, #tpu.memory_space<vmem>>, vector<32x16xf32>
    %cst = arith.constant dense<0.000000e+00> : vector<2x16xf32>
    %2 = tpu.matmul %0, %1, %cst {dimension_numbers = #tpu.dot_dimension_numbers<[1], [0], [0], [1], [0, 0, 1, 1], [], []>} : vector<2x32xf32>, vector<32x16xf32>, vector<2x16xf32> -> vector<2x16xf32>
    %c0_3 = arith.constant 0 : index
    %c0_4 = arith.constant 0 : index
    %3 = vector.load %arg3[%c0_3, %c0_4] : memref<1x16xf32, #tpu.memory_space<vmem>>, vector<1x16xf32>
    %4 = vector.broadcast %3 : vector<1x16xf32> to vector<2x16xf32>
    %5 = arith.addf %2, %4 : vector<2x16xf32>
    %6 = vector.extract_strided_slice %5 {offsets = [0, 0], sizes = [2, 8], strides = [1, 1]} : vector<2x16xf32> to vector<2x8xf32>
    %c0_5 = arith.constant 0 : index
    %c0_6 = arith.constant 0 : index
    %7 = vector.load %arg4[%c0_5, %c0_6] : memref<2x8xf32, #tpu.memory_space<vmem>>, vector<2x8xf32>
    tpu.vector_store %arg4[%c0_5, %c0_6], %6 {strides = array<i32>} : memref<2x8xf32, #tpu.memory_space<vmem>>, vector<2x8xf32>,
    %8 = vector.extract_strided_slice %5 {offsets = [0, 8], sizes = [2, 8], strides = [1, 1]} : vector<2x16xf32> to vector<2x8xf32>
    %c0_7 = arith.constant 0 : index
    %c0_8 = arith.constant 0 : index
    %9 = vector.load %arg5[%c0_7, %c0_8] : memref<2x8xf32, #tpu.memory_space<vmem>>, vector<2x8xf32>
    tpu.vector_store %arg5[%c0_7, %c0_8], %8 {strides = array<i32>} : memref<2x8xf32, #tpu.memory_space<vmem>>, vector<2x8xf32>,
    return
  }
  func.func @transform_0(%arg0: i32) -> (i32, i32) {
    %c0_i32 = arith.constant 0 : i32
    %c0_i32_0 = arith.constant 0 : i32
    return %arg0, %c0_i32 : i32, i32
  }
  func.func @transform_1(%arg0: i32) -> (i32, i32) {
    %c0_i32 = arith.constant 0 : i32
    %c0_i32_0 = arith.constant 0 : i32
    %c0_i32_1 = arith.constant 0 : i32
    return %c0_i32, %c0_i32_0 : i32, i32
  }
  func.func @transform_2(%arg0: i32) -> (i32, i32) {
    %c0_i32 = arith.constant 0 : i32
    %c0_i32_0 = arith.constant 0 : i32
    %c0_i32_1 = arith.constant 0 : i32
    return %c0_i32, %c0_i32_0 : i32, i32
  }
  func.func @transform_3(%arg0: i32) -> (i32, i32) {
    %c0_i32 = arith.constant 0 : i32
    %c0_i32_0 = arith.constant 0 : i32
    return %arg0, %c0_i32 : i32, i32
  }
  func.func @transform_4(%arg0: i32) -> (i32, i32) {
    %c0_i32 = arith.constant 0 : i32
    %c0_i32_0 = arith.constant 0 : i32
    return %arg0, %c0_i32 : i32, i32
  }
}

</mosaic_0001>

<llo_original>
// kernel: tpu_custom_call.1
$region0: #{tpu_custom_call.1}
  #allocation0 [shape = 'u32[]', space=smem, size = 0x4, offset = 0x4, fixed_abs, tag = 'smem constant byte address 0x4 - core index']
  #allocation1 [shape = 'u32[144,128]{1,0:T(1,128)}', space=vmem, size = 0x12000, scoped, tag = 'internal scratch']
  %s0 = inlined_call_operand.vmem [shape: f32[2,32], index: 0, kind: input, shape index: {}]
  %s1 = inlined_call_operand.vmem [shape: f32[32,16], index: 1, kind: input, shape index: {}]
  %s2 = inlined_call_operand.vmem [shape: f32[1,16], index: 2, kind: input, shape index: {}]
  %s3 = inlined_call_operand.hbm [shape: f32[2,8], index: 3, kind: output, shape index: {0}]
  %s4 = inlined_call_operand.hbm [shape: f32[2,8], index: 4, kind: output, shape index: {1}]
  %5 = xla_tuple %s3, %s4
  %s6 = sld [smem:[#allocation0]]
  $region30: #{tpu_custom_call.1} parent=0
    _
  %s8 = ssub.s32 1, %s6
  %s9 = scalar_select 0, %s8, %s6
  $region1: #{tpu_custom_call.1} parent=0
    #allocation2 [shape = 'u8[1024]{0}', space=vmem, size = 0x400, scoped, tag = 'output window, operand 0, single buffered']
    #allocation3 [shape = 's32[1]{0}', space=sflag, size = 0x4, scoped, tag = 'scoped memory for tpu_custom_call.1']
    #allocation4 [shape = 'u8[1024]{0}', space=vmem, size = 0x400, scoped, tag = 'output window, operand 1, single buffered']
    #allocation5 [shape = 's32[1]{0}', space=sflag, size = 0x4, scoped, tag = 'scoped memory for tpu_custom_call.1']
    %10 = vsyncpa [#allocation3], 0
    %11 = vsyncpa [#allocation5], 0
    // Predicated region
    $region2: #{tpu_custom_call.1} parent=1 // pred_check
      _
    $region3: #{tpu_custom_call.1} parent=1 // pred_check_branch
      %13 = sbr.rel (0) target = $region5
    $region4: #{tpu_custom_call.1} parent=1 // pred_region
      _
    $region5: #{tpu_custom_call.1} parent=1 // pred_fallthru
      _
    // Predicated region
    $region6: #{tpu_custom_call.1} parent=1 // pred_check
      _
    $region7: #{tpu_custom_call.1} parent=1 // pred_check_branch
      %15 = sbr.rel (0) target = $region9
    $region8: #{tpu_custom_call.1} parent=1 // pred_region
      _
    $region9: #{tpu_custom_call.1} parent=1 // pred_fallthru
      _
    // Predicated region
    $region10: #{tpu_custom_call.1} parent=1 // pred_check
      _
    $region11: #{tpu_custom_call.1} parent=1 // pred_check_branch
      %17 = sbr.rel (0) target = $region13
    $region12: #{tpu_custom_call.1} parent=1 // pred_region
      _
    $region13: #{tpu_custom_call.1} parent=1 // pred_fallthru
      _
    %v18 = vld [vmem:[%s0] sm:$0x3]
    %v19 = vld [vmem:[%s1] sm:$0xff]
    %v20 = vld [vmem:[%s1 + $0x8] sm:$0xff]
    %v21 = vld [vmem:[%s1 + $0x10] sm:$0xff]
    %v22 = vld [vmem:[%s1 + $0x18] sm:$0xff]
    %v23 = vld [vmem:[%s2] sm:$0x1]
    %v25 = vlaneseq
    %v26 = vshrl.u32 %v25, 7
    %v27 = vsub.s32 0, %v26
    %v28 = vrot.slane %v23, %v27
    %vm30 = vcmask 261120
    %v32 = vsel %vm30, %v18, 0
    %34 = vmatprep.subr.mxu0 0.0
    %35 = vmatpush1.msra.mxu0 %v19
    %36 = vmatprep.subr.mxu0 0.0
    %37 = vmatpush1.msra.mxu0 %v20
    %38 = vmatprep.subr.mxu0 0.0
    %39 = vmatpush1.msra.mxu0 %v21
    %40 = vmatprep.subr.mxu0 0.0
    %41 = vmatpush1.msra.mxu0 %v22
    %42 = vmatprep.subr.mxu0 0.0
    %43 = vmatpush1.msra.mxu0 0.0
    %44 = vmatprep.subr.mxu0 0.0
    %45 = vmatpush1.msra.mxu0 0.0
    %46 = vmatprep.subr.mxu0 0.0
    %47 = vmatpush1.msra.mxu0 0.0
    %48 = vmatprep.subr.mxu0 0.0
    %49 = vmatpush1.msra.mxu0 0.0
    %50 = vmatprep.subr.mxu0 0.0
    %51 = vmatpush1.msra.mxu0 0.0
    %52 = vmatprep.subr.mxu0 0.0
    %53 = vmatpush1.msra.mxu0 0.0
    %54 = vmatprep.subr.mxu0 0.0
    %55 = vmatpush1.msra.mxu0 0.0
    %56 = vmatprep.subr.mxu0 0.0
    %57 = vmatpush1.msra.mxu0 0.0
    %58 = vmatprep.subr.mxu0 0.0
    %59 = vmatpush1.msra.mxu0 0.0
    %60 = vmatprep.subr.mxu0 0.0
    %61 = vmatpush1.msra.mxu0 0.0
    %62 = vmatprep.subr.mxu0 0.0
    %63 = vmatpush1.msra.mxu0 0.0
    %64 = vmatprep.subr.mxu0 0.0
    %65 = vmatpush1.msra.mxu0 0.0
    %66 = vmatprep.subr.mxu0 0.0
    %67 = vmatpush1.msra.mxu0 0.0
    %68 = vmatprep.subr.mxu0 0.0
    %69 = vmatpush1.msra.mxu0 0.0
    %70 = vmatprep.subr.mxu0 0.0
    %71 = vmatpush1.msra.mxu0 0.0
    %72 = vmatprep.subr.mxu0 0.0
    %73 = vmatpush1.msra.mxu0 0.0
    %74 = vmatprep.subr.mxu0 0.0
    %75 = vmatpush1.msra.mxu0 0.0
    %76 = vmatprep.subr.mxu0 0.0
    %77 = vmatpush1.msra.mxu0 0.0
    %78 = vmatprep.subr.mxu0 0.0
    %79 = vmatpush1.msra.mxu0 0.0
    %80 = vmatprep.subr.mxu0 0.0
    %81 = vmatpush1.msra.mxu0 0.0
    %82 = vmatprep.subr.mxu0 0.0
    %83 = vmatpush1.msra.mxu0 0.0
    %84 = vmatprep.subr.mxu0 0.0
    %85 = vmatpush1.msra.mxu0 0.0
    %86 = vmatprep.subr.mxu0 0.0
    %87 = vmatpush1.msra.mxu0 0.0
    %88 = vmatprep.subr.mxu0 0.0
    %89 = vmatpush1.msra.mxu0 0.0
    %90 = vmatprep.subr.mxu0 0.0
    %91 = vmatpush1.msra.mxu0 0.0
    %92 = vmatprep.subr.mxu0 0.0
    %93 = vmatpush1.msra.mxu0 0.0
    %94 = vmatprep.subr.mxu0 0.0
    %95 = vmatpush1.msra.mxu0 0.0
    %96 = vmatprep.subr.mxu0 0.0
    %97 = vmatpush1.msra.mxu0 0.0
    %98 = vmatprep.mubr.f32.mxu0 0.0
    %99 = vmatmul.mubr.f32.gmra.mrb[0].mxu0 %v32
    %v100 = vpop.f32.mrb[0].mxu0
    %v101 = vadd.f32 %v28, %v100
    %v102 = vpop.f32.mrb[0].mxu0
    %103 = vdwg.mxu0
    %vm104 = vcmask 58368
    %105 = vst.msk [vmem:[#allocation2] sm:$0x3] %vm104, %v101
    %107 = vrot.lane.b32.xlu0 %v101, 120
    %v108 = vpop.permute.xlu0 %107
    %110 = vst.msk [vmem:[#allocation4] sm:$0x3] %vm104, %v108
    // Predicated region
    $region14: #{tpu_custom_call.1} parent=1 // pred_check
      _
    $region15: #{tpu_custom_call.1} parent=1 // pred_check_branch
      %112 = sbr.rel (0) target = $region17
    $region16: #{tpu_custom_call.1} parent=1 // pred_region
      %s114 = ssub.s32 32, 32
      %115 = vsyncadd [#allocation3], %s114
      %s117 = sshll.u32 [#allocation2], 4
      %s118 = int_to_ptr.vmem [resolvable:$true] %s117
      %120 = dma.vmem_to_hbm [thread:$0]  %s118, 32, %s3, [#allocation3]
    $region17: #{tpu_custom_call.1} parent=1 // pred_fallthru
      _
    // Predicated region
    $region18: #{tpu_custom_call.1} parent=1 // pred_check
      _
    $region19: #{tpu_custom_call.1} parent=1 // pred_check_branch
      %122 = sbr.rel (0) target = $region21
    $region20: #{tpu_custom_call.1} parent=1 // pred_region
      %s124 = ssub.s32 32, 32
      %125 = vsyncadd [#allocation5], %s124
      %s127 = sshll.u32 [#allocation4], 4
      %s128 = int_to_ptr.vmem [resolvable:$true] %s127
      %130 = dma.vmem_to_hbm [thread:$0]  %s128, 32, %s4, [#allocation5]
    $region21: #{tpu_custom_call.1} parent=1 // pred_fallthru
      _
    // Predicated region
    $region22: #{tpu_custom_call.1} parent=1 // pred_check
      _
    $region23: #{tpu_custom_call.1} parent=1 // pred_check_branch
      %132 = sbr.rel (0) target = $region25
    $region24: #{tpu_custom_call.1} parent=1 // pred_region
      %133 = dma.done [#allocation3], 32
    $region25: #{tpu_custom_call.1} parent=1 // pred_fallthru
      _
    // Predicated region
    $region26: #{tpu_custom_call.1} parent=1 // pred_check
      _
    $region27: #{tpu_custom_call.1} parent=1 // pred_check_branch
      %135 = sbr.rel (0) target = $region29
    $region28: #{tpu_custom_call.1} parent=1 // pred_region
      %136 = dma.done [#allocation5], 32
    $region29: #{tpu_custom_call.1} parent=1 // pred_fallthru
      _
    %137 = vsyncpa [#allocation3], 1
    %138 = vsyncpa [#allocation5], 1

</llo_original>
